<compile_context>
chip_gen: v7x
topology: tpu7x:2x2x1
jax: 0.10.0
libtpu: 0.0.40
codegen_flags: <defaults>
</compile_context>

<pallas_src>
import functools
import math

import jax
import jax.numpy as jnp
from jax import lax
from jax.experimental import pallas as pl
from jax.experimental.pallas import tpu as pltpu

NEG_SLOPE = 0.2                     # nn.LeakyReLU(0.2)
INV_SQRT2 = 1.0 / math.sqrt(2.0)


def _round_up(v, m):
    return (v + m - 1) // m * m


def _lrelu(v):
    return jnp.where(v > 0, v, NEG_SLOPE * v)


def _shift_lanes(x, k):
    """result[:, p] = x[:, p + k], zero-filled out of range (== conv zero padding).

    Acts on the minor (lane) axis of a small (C, L) bf16 tile.  Explicit
    slice+concat keeps the zero-fill semantics unambiguous; pltpu.roll on the
    lane axis is an equivalent XLU-slot alternative (the wrapped elements for
    |k| <= W+3 land only in zero halo/tail lanes), kept as slice+concat here for
    robustness with packed dtypes.
    """
    if k == 0:
        return x
    c, l = x.shape
    fill = jnp.zeros((c, abs(k)), x.dtype)
    if k > 0:
        return jnp.concatenate([x[:, k:], fill], axis=1)
    return jnp.concatenate([fill, x[:, :l + k]], axis=1)


def upconv_kernel(wp, xp_ref, tproj_ref, mask_ref, w1_ref, w2s_ref, b2_ref, out_ref):
    """One grid step processes B images concatenated along lanes.

    xp_ref    : (Cp, L)           raw input, per-image 1-pixel zero halo + zero lane
                                  tail, L = B * P_pad, P_pad = round_up((H+2)*(W+2), 128)
    tproj_ref : (Co, L)           dense_t1(t_emb) + dense bias + conv1 bias,
                                  pre-broadcast over each image's lane span
    mask_ref  : (1, L)            1.0 on interior pixels, 0.0 on halo ring / lane tail
    w1_ref    : (Co, 9*Cp)        conv1 weights, tap-major im2col packing (bf16)
    w2s_ref   : (Co, 9*Co + Cp)   [conv2 im2col weights | 1x1 skip weights] (bf16)
    b2_ref    : (Co, 1)           conv2 bias
    out_ref   : (Co, L)
    """

    def im2col(act_bf):
        # 9 lane-shifted copies stacked on sublanes -> operand of ONE MXU matmul.
        taps = [_shift_lanes(act_bf, dy * wp + dx)
                for dy in (-1, 0, 1) for dx in (-1, 0, 1)]
        return jnp.concatenate(taps, axis=0)            # (9*C, L) bf16

    x = xp_ref[...]                                      # (Cp, L) f32, halo/tail = 0
    a_bf = _lrelu(x).astype(jnp.bfloat16)                # cast ONCE before the taps
    x_bf = x.astype(jnp.bfloat16)                        # pre-activation skip operand

    # conv1 (3x3, pad 1) + (dense_t1(t_emb) + biases) broadcast over space.
    h = jnp.dot(w1_ref[...], im2col(a_bf), preferred_element_type=jnp.float32)
    h = _lrelu(h + tproj_ref[...])
    h = h * mask_ref[...]                                # re-zero halo/tail == conv2 padding

    # conv2 (3x3, pad 1) fused with the 1x1 skip: one matmul over K = 9*Co + Cp.
    im2 = jnp.concatenate([im2col(h.astype(jnp.bfloat16)), x_bf], axis=0)
    o = jnp.dot(w2s_ref[...], im2, preferred_element_type=jnp.float32) + b2_ref[...]
    out_ref[...] = o * jnp.float32(INV_SQRT2)


def _pack_conv(w_hwio, cin_p, cout_p):
    """(kh,kw,Cin,Cout) HWIO -> (cout_p, kh*kw*cin_p) tap-major im2col weight matrix."""
    kh, kw, cin, cout = w_hwio.shape
    w = jnp.transpose(w_hwio.reshape(kh * kw, cin, cout), (2, 0, 1))  # (Cout, taps, Cin)
    w = jnp.pad(w, ((0, cout_p - cout), (0, 0), (0, cin_p - cin)))
    return w.reshape(cout_p, kh * kw * cin_p)


@jax.jit
def _up_conv_block(x, t_emb, params):
    n, cin, h, w = x.shape
    cout = params["w1"].shape[-1]
    cp, coutp = _round_up(cin, 8), _round_up(cout, 8)
    hp, wp = h + 2, w + 2
    assert hp >= 3 and wp >= 3, "zero-halo-as-padding trick assumes 3x3 / pad=1"
    p_img = hp * wp
    p_pad = _round_up(p_img, 128)          # lane-dense per-image span (324 -> 384)

    # At most 2 grid steps: both v7x TensorCores busy; on single-TC v5e/v6e the
    # remaining images are batched along lanes inside each step.
    steps = 2 if n >= 2 else 1
    b = -(-n // steps)                     # images per grid step
    n_pad = steps * b
    lb = b * p_pad

    x = x.astype(jnp.float32)
    # Channel pad (sublane multiple) + 1-pixel zero halo + zero lane tail; then
    # concatenate the B images of each step along the lane axis.
    xp = jnp.pad(x, ((0, n_pad - n), (0, cp - cin), (1, 1), (1, 1)))
    xp = jnp.pad(xp.reshape(n_pad, cp, p_img), ((0, 0), (0, 0), (0, p_pad - p_img)))
    xp = xp.reshape(steps, b, cp, p_pad).transpose(0, 2, 1, 3).reshape(steps, cp, lb)

    # t-projection hoisted out of the kernel: one (N,T)x(T,Co) GEMM, then folded
    # with the dense + conv1 biases and pre-broadcast over each image's lane span.
    tproj = (jnp.dot(t_emb.astype(jnp.float32), params["dw"].astype(jnp.float32),
                     precision=lax.Precision.HIGHEST)
             + params["db"] + params["b1"])                              # (N, Co)
    tproj = jnp.pad(tproj, ((0, n_pad - n), (0, coutp - cout)))
    tproj_b = jnp.broadcast_to(tproj[:, :, None], (n_pad, coutp, p_pad))
    tproj_b = (tproj_b.reshape(steps, b, coutp, p_pad)
               .transpose(0, 2, 1, 3).reshape(steps, coutp, lb))

    # Interior mask: 1 on real pixels, 0 on halo ring and lane-tail padding.
    mask1 = jnp.pad(jnp.ones((h, w), jnp.float32), ((1, 1), (1, 1))).reshape(p_img)
    mask1 = jnp.pad(mask1, (0, p_pad - p_img))
    mask = jnp.tile(mask1, (b,)).reshape(1, lb)

    w1m = _pack_conv(params["w1"], cp, coutp).astype(jnp.bfloat16)       # (Co, 9*Cp)
    w2m = _pack_conv(params["w2"], coutp, coutp)                         # (Co, 9*Co)
    wsm = _pack_conv(params["ws"], cp, coutp)                            # (Co, Cp)
    w2s = jnp.concatenate([w2m, wsm], axis=1).astype(jnp.bfloat16)       # fused conv2+skip
    b2c = jnp.pad(params["b2"].reshape(cout, 1), ((0, coutp - cout), (0, 0)))

    # TODO(synk): for production score_sde sizes (C>=128, H=W>=64): tile H with a 1-row
    # halo via the index_map (fusing the halo pad into the kernel), set
    # vmem_limit_bytes explicitly (v7x: 64 MiB physical), use per-tap-row accumulating
    # matmuls instead of materializing the full (9*C, P) im2col buffer, and drop
    # double-buffering (pl.Buffered(1)) on the constant-index weight/bias/mask blocks.
    out = pl.pallas_call(
        functools.partial(upconv_kernel, wp),
        out_shape=jax.ShapeDtypeStruct((steps, coutp, lb), jnp.float32),
        grid=(steps,),
        in_specs=[
            pl.BlockSpec((None, cp, lb), lambda i: (i, 0, 0)),       # padded input (per step)
            pl.BlockSpec((None, coutp, lb), lambda i: (i, 0, 0)),    # t-projection (+ biases)
            pl.BlockSpec((1, lb), lambda i: (0, 0)),                 # interior mask (resident)
            pl.BlockSpec((coutp, 9 * cp), lambda i: (0, 0)),         # conv1 im2col weights
            pl.BlockSpec((coutp, 9 * coutp + cp), lambda i: (0, 0)), # conv2 + skip weights
            pl.BlockSpec((coutp, 1), lambda i: (0, 0)),              # conv2 bias
        ],
        out_specs=pl.BlockSpec((None, coutp, lb), lambda i: (i, 0, 0)),
        compiler_params=pltpu.CompilerParams(dimension_semantics=("parallel",)),
    )(xp, tproj_b, mask, w1m, w2s, b2c)

    # Un-batch the lane axis, drop halo ring / lane tail / channel padding; NCHW out.
    out = (out.reshape(steps, coutp, b, p_pad).transpose(0, 2, 1, 3)
              .reshape(n_pad, coutp, p_pad))
    out = out[:n, :cout, :p_img].reshape(n, cout, hp, wp)[:, :, 1:1 + h, 1:1 + w]
    return out


def up_conv_block(x_nchw, t_emb, params, upsample=False):
    """UpConvBlock forward. x_nchw: (N, Cin, H, W), t_emb: (N, t_emb_dim) -> (N, Cout, H, W)."""
    # TODO(synk): upsample=True path (FIR up_or_down_sampling.upsample_2d of both `out`
    # and `input`, fir_kernel=(1,3,3,1)) not implemented; module default is False.
    assert not upsample
    return _up_conv_block(x_nchw, t_emb, params)


def init_params(key, in_ch, out_ch, t_dim):
    # Synthetic init (the real conv2 uses init_scale=0.0, i.e. zero weights at init;
    # small random weights are used so the whole kernel is actually exercised).
    ks = jax.random.split(key, 7)
    s = 0.1
    return {
        "w1": jax.random.normal(ks[0], (3, 3, in_ch, out_ch), jnp.float32) * s,   # HWIO
        "b1": jax.random.normal(ks[1], (out_ch,), jnp.float32) * s,
        "dw": jax.random.normal(ks[2], (t_dim, out_ch), jnp.float32) * s,
        "db": jax.random.normal(ks[3], (out_ch,), jnp.float32) * s,
        "w2": jax.random.normal(ks[4], (3, 3, out_ch, out_ch), jnp.float32) * s,  # HWIO
        "b2": jax.random.normal(ks[5], (out_ch,), jnp.float32) * s,
        "ws": jax.random.normal(ks[6], (1, 1, in_ch, out_ch), jnp.float32) * s,   # 1x1, no bias
    }


def reference(x, t_emb, p, matmul_dtype=jnp.float32):
    """Pure-JAX reference of the PyTorch forward (NCHW).  matmul_dtype=bfloat16 mirrors
    the kernel's bf16-input / f32-accumulate MXU convolutions."""
    dn = ("NCHW", "HWIO", "NCHW")
    prec = (lax.Precision.HIGHEST if matmul_dtype == jnp.float32
            else lax.Precision.DEFAULT)

    def conv(a, w):
        return lax.conv_general_dilated(
            a.astype(matmul_dtype), w.astype(matmul_dtype), (1, 1), "SAME",
            dimension_numbers=dn, precision=prec,
            preferred_element_type=jnp.float32)

    o = _lrelu(x)
    o = conv(o, p["w1"]) + p["b1"][None, :, None, None]
    tproj = jnp.dot(t_emb, p["dw"], precision=lax.Precision.HIGHEST) + p["db"]
    o = _lrelu(o + tproj[:, :, None, None])           # dense_t1 stays f32, like the kernel
    o = conv(o, p["w2"]) + p["b2"][None, :, None, None]
    skip = conv(x, p["ws"])
    return (o + skip) * jnp.float32(INV_SQRT2)


if __name__ == "__main__":
    key = jax.random.PRNGKey(0)
    kx, kt, kp = jax.random.split(key, 3)
    N, Cin, Cout, H, W, T = 2, 4, 8, 16, 16, 128

    x = jax.random.normal(kx, (N, Cin, H, W), jnp.float32)      # NCHW, like PyTorch
    t_emb = jax.random.normal(kt, (N, T), jnp.float32)
    params = init_params(kp, Cin, Cout, T)

    out = jax.block_until_ready(up_conv_block(x, t_emb, params))
    assert out.shape == (N, Cout, H, W) and out.dtype == jnp.float32

    # Precision-matched check (reference convs also use bf16 inputs + f32 accumulate).
    err_bf = float(jnp.max(jnp.abs(out - reference(x, t_emb, params, jnp.bfloat16))))
    # Sanity check vs. the full-f32 reference (difference = bf16 MXU input quantization).
    err_f32 = float(jnp.max(jnp.abs(out - reference(x, t_emb, params, jnp.float32))))
    assert err_bf < 1e-2, f"mismatch vs bf16-matched reference: {err_bf}"
    assert err_f32 < 7e-2, f"mismatch vs f32 reference: {err_f32}"

    print("KERNEL_OK")
</pallas_src>

<mosaic_0001>
module attributes {stable_mosaic.version = 11 : i64} {
  func.func @upconv_kernel(%arg0: i32, %arg1: memref<1x8x384xf32, #tpu.memory_space<vmem>>, %arg2: memref<1x8x384xf32, #tpu.memory_space<vmem>>, %arg3: memref<1x384xf32, #tpu.memory_space<vmem>>, %arg4: memref<8x72xbf16, #tpu.memory_space<vmem>>, %arg5: memref<8x80xbf16, #tpu.memory_space<vmem>>, %arg6: memref<8x1xf32, #tpu.memory_space<vmem>>, %arg7: memref<1x8x384xf32, #tpu.memory_space<vmem>>) attributes {dimension_semantics = [#tpu.dimension_semantics<parallel>], iteration_bounds = array<i64: 2>, scalar_prefetch = 0 : i64, scratch_operands = 0 : i64, tpu.core_type = #tpu.core_type<tc>, window_params = [{transform_indices = @transform_0, window_bounds = array<i64: 1, 8, 384>}, {transform_indices = @transform_1, window_bounds = array<i64: 1, 8, 384>}, {pipeline_mode = #tpu.pipeline_mode<synchronous>, transform_indices = @transform_2, window_bounds = array<i64: 1, 384>}, {pipeline_mode = #tpu.pipeline_mode<synchronous>, transform_indices = @transform_3, window_bounds = array<i64: 8, 72>}, {pipeline_mode = #tpu.pipeline_mode<synchronous>, transform_indices = @transform_4, window_bounds = array<i64: 8, 80>}, {pipeline_mode = #tpu.pipeline_mode<synchronous>, transform_indices = @transform_5, window_bounds = array<i64: 8, 1>}, {transform_indices = @transform_6, window_bounds = array<i64: 1, 8, 384>}]} {
    %c0 = arith.constant 0 : index
    %c0_0 = arith.constant 0 : index
    %c0_1 = arith.constant 0 : index
    %0 = vector.load %arg1[%c0, %c0_0, %c0_1] : memref<1x8x384xf32, #tpu.memory_space<vmem>>, vector<1x8x384xf32>
    %1 = vector.shape_cast %0 : vector<1x8x384xf32> to vector<8x384xf32>
    %cst = arith.constant 0.000000e+00 : f32
    %2 = vector.broadcast %cst : f32 to vector<8x384xf32>
    %3 = arith.cmpf ogt, %1, %2 : vector<8x384xf32>
    %cst_2 = arith.constant 2.000000e-01 : f32
    %4 = vector.broadcast %cst_2 : f32 to vector<8x384xf32>
    %5 = arith.mulf %4, %1 : vector<8x384xf32>
    %6 = arith.select %3, %1, %5 : vector<8x384xi1>, vector<8x384xf32>
    %7 = arith.truncf %6 : vector<8x384xf32> to vector<8x384xbf16>
    %8 = arith.truncf %1 : vector<8x384xf32> to vector<8x384xbf16>
    %c0_3 = arith.constant 0 : index
    %c0_4 = arith.constant 0 : index
    %9 = vector.load %arg4[%c0_3, %c0_4] : memref<8x72xbf16, #tpu.memory_space<vmem>>, vector<8x72xbf16>
    %cst_5 = arith.constant 0.000000e+00 : bf16
    %10 = vector.broadcast %cst_5 : bf16 to vector<8x19xbf16>
    %11 = vector.extract_strided_slice %7 {offsets = [0, 0], sizes = [8, 365], strides = [1, 1]} : vector<8x384xbf16> to vector<8x365xbf16>
    %12 = tpu.concatenate %10, %11 in 1 : vector<8x19xbf16>, vector<8x365xbf16> -> vector<8x384xbf16>
    %cst_6 = arith.constant 0.000000e+00 : bf16
    %13 = vector.broadcast %cst_6 : bf16 to vector<8x18xbf16>
    %14 = vector.extract_strided_slice %7 {offsets = [0, 0], sizes = [8, 366], strides = [1, 1]} : vector<8x384xbf16> to vector<8x366xbf16>
    %15 = tpu.concatenate %13, %14 in 1 : vector<8x18xbf16>, vector<8x366xbf16> -> vector<8x384xbf16>
    %cst_7 = arith.constant 0.000000e+00 : bf16
    %16 = vector.broadcast %cst_7 : bf16 to vector<8x17xbf16>
    %17 = vector.extract_strided_slice %7 {offsets = [0, 0], sizes = [8, 367], strides = [1, 1]} : vector<8x384xbf16> to vector<8x367xbf16>
    %18 = tpu.concatenate %16, %17 in 1 : vector<8x17xbf16>, vector<8x367xbf16> -> vector<8x384xbf16>
    %cst_8 = arith.constant 0.000000e+00 : bf16
    %19 = vector.broadcast %cst_8 : bf16 to vector<8x1xbf16>
    %20 = vector.extract_strided_slice %7 {offsets = [0, 0], sizes = [8, 383], strides = [1, 1]} : vector<8x384xbf16> to vector<8x383xbf16>
    %21 = tpu.concatenate %19, %20 in 1 : vector<8x1xbf16>, vector<8x383xbf16> -> vector<8x384xbf16>
    %cst_9 = arith.constant 0.000000e+00 : bf16
    %22 = vector.broadcast %cst_9 : bf16 to vector<8x1xbf16>
    %23 = vector.extract_strided_slice %7 {offsets = [0, 1], sizes = [8, 383], strides = [1, 1]} : vector<8x384xbf16> to vector<8x383xbf16>
    %24 = tpu.concatenate %23, %22 in 1 : vector<8x383xbf16>, vector<8x1xbf16> -> vector<8x384xbf16>
    %cst_10 = arith.constant 0.000000e+00 : bf16
    %25 = vector.broadcast %cst_10 : bf16 to vector<8x17xbf16>
    %26 = vector.extract_strided_slice %7 {offsets = [0, 17], sizes = [8, 367], strides = [1, 1]} : vector<8x384xbf16> to vector<8x367xbf16>
    %27 = tpu.concatenate %26, %25 in 1 : vector<8x367xbf16>, vector<8x17xbf16> -> vector<8x384xbf16>
    %cst_11 = arith.constant 0.000000e+00 : bf16
    %28 = vector.broadcast %cst_11 : bf16 to vector<8x18xbf16>
    %29 = vector.extract_strided_slice %7 {offsets = [0, 18], sizes = [8, 366], strides = [1, 1]} : vector<8x384xbf16> to vector<8x366xbf16>
    %30 = tpu.concatenate %29, %28 in 1 : vector<8x366xbf16>, vector<8x18xbf16> -> vector<8x384xbf16>
    %cst_12 = arith.constant 0.000000e+00 : bf16
    %31 = vector.broadcast %cst_12 : bf16 to vector<8x19xbf16>
    %32 = vector.extract_strided_slice %7 {offsets = [0, 19], sizes = [8, 365], strides = [1, 1]} : vector<8x384xbf16> to vector<8x365xbf16>
    %33 = tpu.concatenate %32, %31 in 1 : vector<8x365xbf16>, vector<8x19xbf16> -> vector<8x384xbf16>
    %34 = tpu.concatenate %12, %15, %18, %21, %7, %24, %27, %30, %33 in 0 : vector<8x384xbf16>, vector<8x384xbf16>, vector<8x384xbf16>, vector<8x384xbf16>, vector<8x384xbf16>, vector<8x384xbf16>, vector<8x384xbf16>, vector<8x384xbf16>, vector<8x384xbf16> -> vector<72x384xbf16>
    %cst_13 = arith.constant dense<0.000000e+00> : vector<8x384xf32>
    %35 = tpu.matmul %9, %34, %cst_13 {dimension_numbers = #tpu.dot_dimension_numbers<[1], [0], [0], [1], [0, 0, 1, 1], [], []>} : vector<8x72xbf16>, vector<72x384xbf16>, vector<8x384xf32> -> vector<8x384xf32>
    %c0_14 = arith.constant 0 : index
    %c0_15 = arith.constant 0 : index
    %c0_16 = arith.constant 0 : index
    %36 = vector.load %arg2[%c0_14, %c0_15, %c0_16] : memref<1x8x384xf32, #tpu.memory_space<vmem>>, vector<1x8x384xf32>
    %37 = vector.shape_cast %36 : vector<1x8x384xf32> to vector<8x384xf32>
    %38 = arith.addf %35, %37 : vector<8x384xf32>
    %cst_17 = arith.constant 0.000000e+00 : f32
    %39 = vector.broadcast %cst_17 : f32 to vector<8x384xf32>
    %40 = arith.cmpf ogt, %38, %39 : vector<8x384xf32>
    %cst_18 = arith.constant 2.000000e-01 : f32
    %41 = vector.broadcast %cst_18 : f32 to vector<8x384xf32>
    %42 = arith.mulf %41, %38 : vector<8x384xf32>
    %43 = arith.select %40, %38, %42 : vector<8x384xi1>, vector<8x384xf32>
    %c0_19 = arith.constant 0 : index
    %c0_20 = arith.constant 0 : index
    %44 = vector.load %arg3[%c0_19, %c0_20] : memref<1x384xf32, #tpu.memory_space<vmem>>, vector<1x384xf32>
    %45 = vector.broadcast %44 : vector<1x384xf32> to vector<8x384xf32>
    %46 = arith.mulf %43, %45 : vector<8x384xf32>
    %47 = arith.truncf %46 : vector<8x384xf32> to vector<8x384xbf16>
    %cst_21 = arith.constant 0.000000e+00 : bf16
    %48 = vector.broadcast %cst_21 : bf16 to vector<8x19xbf16>
    %49 = vector.extract_strided_slice %47 {offsets = [0, 0], sizes = [8, 365], strides = [1, 1]} : vector<8x384xbf16> to vector<8x365xbf16>
    %50 = tpu.concatenate %48, %49 in 1 : vector<8x19xbf16>, vector<8x365xbf16> -> vector<8x384xbf16>
    %cst_22 = arith.constant 0.000000e+00 : bf16
    %51 = vector.broadcast %cst_22 : bf16 to vector<8x18xbf16>
    %52 = vector.extract_strided_slice %47 {offsets = [0, 0], sizes = [8, 366], strides = [1, 1]} : vector<8x384xbf16> to vector<8x366xbf16>
    %53 = tpu.concatenate %51, %52 in 1 : vector<8x18xbf16>, vector<8x366xbf16> -> vector<8x384xbf16>
    %cst_23 = arith.constant 0.000000e+00 : bf16
    %54 = vector.broadcast %cst_23 : bf16 to vector<8x17xbf16>
    %55 = vector.extract_strided_slice %47 {offsets = [0, 0], sizes = [8, 367], strides = [1, 1]} : vector<8x384xbf16> to vector<8x367xbf16>
    %56 = tpu.concatenate %54, %55 in 1 : vector<8x17xbf16>, vector<8x367xbf16> -> vector<8x384xbf16>
    %cst_24 = arith.constant 0.000000e+00 : bf16
    %57 = vector.broadcast %cst_24 : bf16 to vector<8x1xbf16>
    %58 = vector.extract_strided_slice %47 {offsets = [0, 0], sizes = [8, 383], strides = [1, 1]} : vector<8x384xbf16> to vector<8x383xbf16>
    %59 = tpu.concatenate %57, %58 in 1 : vector<8x1xbf16>, vector<8x383xbf16> -> vector<8x384xbf16>
    %cst_25 = arith.constant 0.000000e+00 : bf16
    %60 = vector.broadcast %cst_25 : bf16 to vector<8x1xbf16>
    %61 = vector.extract_strided_slice %47 {offsets = [0, 1], sizes = [8, 383], strides = [1, 1]} : vector<8x384xbf16> to vector<8x383xbf16>
    %62 = tpu.concatenate %61, %60 in 1 : vector<8x383xbf16>, vector<8x1xbf16> -> vector<8x384xbf16>
    %cst_26 = arith.constant 0.000000e+00 : bf16
    %63 = vector.broadcast %cst_26 : bf16 to vector<8x17xbf16>
    %64 = vector.extract_strided_slice %47 {offsets = [0, 17], sizes = [8, 367], strides = [1, 1]} : vector<8x384xbf16> to vector<8x367xbf16>
    %65 = tpu.concatenate %64, %63 in 1 : vector<8x367xbf16>, vector<8x17xbf16> -> vector<8x384xbf16>
    %cst_27 = arith.constant 0.000000e+00 : bf16
    %66 = vector.broadcast %cst_27 : bf16 to vector<8x18xbf16>
    %67 = vector.extract_strided_slice %47 {offsets = [0, 18], sizes = [8, 366], strides = [1, 1]} : vector<8x384xbf16> to vector<8x366xbf16>
    %68 = tpu.concatenate %67, %66 in 1 : vector<8x366xbf16>, vector<8x18xbf16> -> vector<8x384xbf16>
    %cst_28 = arith.constant 0.000000e+00 : bf16
    %69 = vector.broadcast %cst_28 : bf16 to vector<8x19xbf16>
    %70 = vector.extract_strided_slice %47 {offsets = [0, 19], sizes = [8, 365], strides = [1, 1]} : vector<8x384xbf16> to vector<8x365xbf16>
    %71 = tpu.concatenate %70, %69 in 1 : vector<8x365xbf16>, vector<8x19xbf16> -> vector<8x384xbf16>
    %72 = tpu.concatenate %50, %53, %56, %59, %47, %62, %65, %68, %71 in 0 : vector<8x384xbf16>, vector<8x384xbf16>, vector<8x384xbf16>, vector<8x384xbf16>, vector<8x384xbf16>, vector<8x384xbf16>, vector<8x384xbf16>, vector<8x384xbf16>, vector<8x384xbf16> -> vector<72x384xbf16>
    %73 = tpu.concatenate %72, %8 in 0 : vector<72x384xbf16>, vector<8x384xbf16> -> vector<80x384xbf16>
    %c0_29 = arith.constant 0 : index
    %c0_30 = arith.constant 0 : index
    %74 = vector.load %arg5[%c0_29, %c0_30] : memref<8x80xbf16, #tpu.memory_space<vmem>>, vector<8x80xbf16>
    %cst_31 = arith.constant dense<0.000000e+00> : vector<8x384xf32>
    %75 = tpu.matmul %74, %73, %cst_31 {dimension_numbers = #tpu.dot_dimension_numbers<[1], [0], [0], [1], [0, 0, 1, 1], [], []>} : vector<8x80xbf16>, vector<80x384xbf16>, vector<8x384xf32> -> vector<8x384xf32>
    %c0_32 = arith.constant 0 : index
    %c0_33 = arith.constant 0 : index
    %76 = vector.load %arg6[%c0_32, %c0_33] : memref<8x1xf32, #tpu.memory_space<vmem>>, vector<8x1xf32>
    %77 = vector.broadcast %76 : vector<8x1xf32> to vector<8x384xf32>
    %78 = arith.addf %75, %77 : vector<8x384xf32>
    %cst_34 = arith.constant 0.707106769 : f32
    %79 = vector.broadcast %cst_34 : f32 to vector<8x384xf32>
    %80 = arith.mulf %78, %79 : vector<8x384xf32>
    %c0_35 = arith.constant 0 : index
    %c0_36 = arith.constant 0 : index
    %c0_37 = arith.constant 0 : index
    %81 = vector.load %arg7[%c0_35, %c0_36, %c0_37] : memref<1x8x384xf32, #tpu.memory_space<vmem>>, vector<1x8x384xf32>
    %82 = vector.shape_cast %81 : vector<1x8x384xf32> to vector<8x384xf32>
    %83 = vector.shape_cast %80 : vector<8x384xf32> to vector<1x8x384xf32>
    tpu.vector_store %arg7[%c0_35, %c0_36, %c0_37], %83 {strides = array<i32>} : memref<1x8x384xf32, #tpu.memory_space<vmem>>, vector<1x8x384xf32>,
    return
  }
  func.func @transform_0(%arg0: i32) -> (i32, i32, i32) {
    %c0_i32 = arith.constant 0 : i32
    %c0_i32_0 = arith.constant 0 : i32
    %c0_i32_1 = arith.constant 0 : i32
    return %arg0, %c0_i32, %c0_i32_0 : i32, i32, i32
  }
  func.func @transform_1(%arg0: i32) -> (i32, i32, i32) {
    %c0_i32 = arith.constant 0 : i32
    %c0_i32_0 = arith.constant 0 : i32
    %c0_i32_1 = arith.constant 0 : i32
    return %arg0, %c0_i32, %c0_i32_0 : i32, i32, i32
  }
  func.func @transform_2(%arg0: i32) -> (i32, i32) {
    %c0_i32 = arith.constant 0 : i32
    %c0_i32_0 = arith.constant 0 : i32
    %c0_i32_1 = arith.constant 0 : i32
    return %c0_i32, %c0_i32_0 : i32, i32
  }
  func.func @transform_3(%arg0: i32) -> (i32, i32) {
    %c0_i32 = arith.constant 0 : i32
    %c0_i32_0 = arith.constant 0 : i32
    %c0_i32_1 = arith.constant 0 : i32
    return %c0_i32, %c0_i32_0 : i32, i32
  }
  func.func @transform_4(%arg0: i32) -> (i32, i32) {
    %c0_i32 = arith.constant 0 : i32
    %c0_i32_0 = arith.constant 0 : i32
    %c0_i32_1 = arith.constant 0 : i32
    return %c0_i32, %c0_i32_0 : i32, i32
  }
  func.func @transform_5(%arg0: i32) -> (i32, i32) {
    %c0_i32 = arith.constant 0 : i32
    %c0_i32_0 = arith.constant 0 : i32
    %c0_i32_1 = arith.constant 0 : i32
    return %c0_i32, %c0_i32_0 : i32, i32
  }
  func.func @transform_6(%arg0: i32) -> (i32, i32, i32) {
    %c0_i32 = arith.constant 0 : i32
    %c0_i32_0 = arith.constant 0 : i32
    %c0_i32_1 = arith.constant 0 : i32
    return %arg0, %c0_i32, %c0_i32_0 : i32, i32, i32
  }
}

</mosaic_0001>

<llo_original>
// kernel: tile.1
$region0: #{tile.1}
  #allocation0 [shape = 's32[1]{0}', space=sflag, size = 0x4, scoped, tag = 'scoped memory for tile.1']
  %s0 = inlined_call_operand.vmem [shape: f32[384], index: 0, kind: input, shape index: {}]
  %s1 = inlined_call_operand.vmem [shape: f32[1,384], index: 1, kind: output, shape index: {}]
  // Predicated region
  $region2: #{tile.1} parent=0 // pred_check
    _
  $region3: #{tile.1} parent=0 // pred_check_branch
    %3 = sbr.rel (0) target = $region5
  $region4: #{tile.1} parent=0 // pred_region
    _
  $region5: #{tile.1} parent=0 // pred_fallthru
    _
  %v4 = vld [vmem:[%s0] ss:$0 sm:$0xff]
  %5 = vst [vmem:[%s1] sm:$0x1] %v4
  %s6 = scalar_lea.vmem %s0, 1
  %v7 = vld [vmem:[%s6] ss:$0 sm:$0xff]
  %s8 = scalar_lea.vmem %s1, 1
  %9 = vst [vmem:[%s8] sm:$0x1] %v7
  %s10 = scalar_lea.vmem %s0, 2
  %v11 = vld [vmem:[%s10] ss:$0 sm:$0xff]
  %s12 = scalar_lea.vmem %s1, 2
  %13 = vst [vmem:[%s12] sm:$0x1] %v11

// kernel: _up_conv_block.1
$region0: #{_up_conv_block.1}
  #allocation0 [shape = 'u32[]', space=smem, size = 0x4, offset = 0x4, fixed_abs, tag = 'smem constant byte address 0x4 - core index']
  #allocation1 [shape = 'u32[144,128]{1,0:T(1,128)}', space=vmem, size = 0x12000, scoped, tag = 'internal scratch']
  %s0 = inlined_call_operand.vmem [shape: f32[2,8,384], index: 0, kind: input, shape index: {}]
  %s1 = inlined_call_operand.vmem [shape: f32[2,8,384], index: 1, kind: input, shape index: {}]
  %s2 = inlined_call_operand.vmem [shape: f32[1,384], index: 2, kind: input, shape index: {}]
  %s3 = inlined_call_operand.vmem [shape: bf16[8,72], index: 3, kind: input, shape index: {}]
  %s4 = inlined_call_operand.vmem [shape: bf16[8,80], index: 4, kind: input, shape index: {}]
  %s5 = inlined_call_operand.vmem [shape: f32[8,1], index: 5, kind: input, shape index: {}]
  %s6 = inlined_call_operand.vmem [shape: f32[2,8,384], index: 6, kind: output, shape index: {}]
  %s7 = sld [smem:[#allocation0]]
  $region57: #{_up_conv_block.1} parent=0
    _
  %s9 = ssub.s32 1, %s7
  %s10 = scalar_select 0, %s9, %s7
  loop: start=0, step=1, limit=4
  $region2: #{_up_conv_block.1} parent=0 // loop_pre_header
    _
  $region3: #{_up_conv_block.1} parent=0 // loop_header
    %s12 = sphi 0, %s16
    %p13 = scmp.ge.s32.totalorder %s12, 4
    %s22 = sphi 0, %s24
    %s25 = sphi 0, %s22
    %s26 = sphi 0, %s25
    %s42 = sphi 0, %s26
    %s48 = sphi 0, %s50
    %s51 = sphi 0, %s48
    %s52 = sphi 0, %s51
    %s68 = sphi 0, %s52
    %s72 = sphi 0, %s72
    %s74 = sphi 0, %s72
    %s75 = sphi 0, %s74
    %s89 = sphi 0, %s75
    %s93 = sphi 0, %s93
    %s95 = sphi 0, %s93
    %s96 = sphi 0, %s95
    %s110 = sphi 0, %s96
    %s114 = sphi 0, %s114
    %s116 = sphi 0, %s114
    %s117 = sphi 0, %s116
    %s131 = sphi 0, %s117
    %s135 = sphi 0, %s135
    %s137 = sphi 0, %s135
    %s138 = sphi 0, %s137
    %s152 = sphi 0, %s138
    %s158 = sphi 0, %s160
    %s161 = sphi 0, %s158
    %s162 = sphi 0, %s161
    %s178 = sphi 0, %s162
  $region4: #{_up_conv_block.1} parent=0 // loop_header_branch
    %15 = sbr.rel (%p13) target = $region8
  $region5: #{_up_conv_block.1} parent=0 // loop_body
    %s17 = ssub.s32 %s12, 1
    %s18 = ssub.s32 %s12, 2
    %s19 = sadd.s32 %s12, 1
    %s20 = ssub.s32 %s12, %s19
    %p21 = scmp.eq.s32.totalorder %s20, 0
    %s23 = sadd.s32 %s22, 1
    %s24 = scalar_select %p21, %s22, %s23
    %p27 = pneg %p21
    %p28 = scmp.eq.s32.totalorder %s12, 1
    %p29 = por %p27, %p28
    %p30 = scmp.ne.s32.totalorder %s22, %s25
    %p31 = scmp.eq.s32.totalorder %s12, 0
    %p32 = por %p30, %p31
    %p33 = scmp.ne.s32.totalorder %s22, %s25
    %p34 = scmp.eq.s32.totalorder %s17, 1
    %p35 = por %p33, %p34
    %p36 = scmp.ne.s32.totalorder %s25, %s26
    %p37 = scmp.eq.s32.totalorder %s17, 0
    %p38 = por %p36, %p37
    %p39 = scmp.ne.s32.totalorder %s25, %s26
    %p40 = scmp.eq.s32.totalorder %s18, 1
    %p41 = por %p39, %p40
    %p43 = scmp.ne.s32.totalorder %s26, %s42
    %p44 = scmp.eq.s32.totalorder %s18, 0
    %p45 = por %p43, %p44
    %s46 = ssub.s32 %s12, %s19
    %p47 = scmp.eq.s32.totalorder %s46, 0
    %s49 = sadd.s32 %s48, 1
    %s50 = scalar_select %p47, %s48, %s49
    %p53 = pneg %p47
    %p54 = scmp.eq.s32.totalorder %s12, 1
    %p55 = por %p53, %p54
    %p56 = scmp.ne.s32.totalorder %s48, %s51
    %p57 = scmp.eq.s32.totalorder %s12, 0
    %p58 = por %p56, %p57
    %p59 = scmp.ne.s32.totalorder %s48, %s51
    %p60 = scmp.eq.s32.totalorder %s17, 1
    %p61 = por %p59, %p60
    %p62 = scmp.ne.s32.totalorder %s51, %s52
    %p63 = scmp.eq.s32.totalorder %s17, 0
    %p64 = por %p62, %p63
    %p65 = scmp.ne.s32.totalorder %s51, %s52
    %p66 = scmp.eq.s32.totalorder %s18, 1
    %p67 = por %p65, %p66
    %p69 = scmp.ne.s32.totalorder %s52, %s68
    %p70 = scmp.eq.s32.totalorder %s18, 0
    %p71 = por %p69, %p70
    %s73 = sadd.s32 %s72, 1
    %p76 = scmp.eq.s32.totalorder %s12, 1
    %p77 = scmp.ne.s32.totalorder %s72, %s74
    %p78 = scmp.eq.s32.totalorder %s12, 0
    %p79 = por %p77, %p78
    %p80 = scmp.ne.s32.totalorder %s72, %s74
    %p81 = scmp.eq.s32.totalorder %s17, 1
    %p82 = por %p80, %p81
    %p83 = scmp.ne.s32.totalorder %s74, %s75
    %p84 = scmp.eq.s32.totalorder %s17, 0
    %p85 = por %p83, %p84
    %p86 = scmp.ne.s32.totalorder %s74, %s75
    %p87 = scmp.eq.s32.totalorder %s18, 1
    %p88 = por %p86, %p87
    %p90 = scmp.ne.s32.totalorder %s75, %s89
    %p91 = scmp.eq.s32.totalorder %s18, 0
    %p92 = por %p90, %p91
    %s94 = sadd.s32 %s93, 1
    %p97 = scmp.eq.s32.totalorder %s12, 1
    %p98 = scmp.ne.s32.totalorder %s93, %s95
    %p99 = scmp.eq.s32.totalorder %s12, 0
    %p100 = por %p98, %p99
    %p101 = scmp.ne.s32.totalorder %s93, %s95
    %p102 = scmp.eq.s32.totalorder %s17, 1
    %p103 = por %p101, %p102
    %p104 = scmp.ne.s32.totalorder %s95, %s96
    %p105 = scmp.eq.s32.totalorder %s17, 0
    %p106 = por %p104, %p105
    %p107 = scmp.ne.s32.totalorder %s95, %s96
    %p108 = scmp.eq.s32.totalorder %s18, 1
    %p109 = por %p107, %p108
    %p111 = scmp.ne.s32.totalorder %s96, %s110
    %p112 = scmp.eq.s32.totalorder %s18, 0
    %p113 = por %p111, %p112
    %s115 = sadd.s32 %s114, 1
    %p118 = scmp.eq.s32.totalorder %s12, 1
    %p119 = scmp.ne.s32.totalorder %s114, %s116
    %p120 = scmp.eq.s32.totalorder %s12, 0
    %p121 = por %p119, %p120
    %p122 = scmp.ne.s32.totalorder %s114, %s116
    %p123 = scmp.eq.s32.totalorder %s17, 1
    %p124 = por %p122, %p123
    %p125 = scmp.ne.s32.totalorder %s116, %s117
    %p126 = scmp.eq.s32.totalorder %s17, 0
    %p127 = por %p125, %p126
    %p128 = scmp.ne.s32.totalorder %s116, %s117
    %p129 = scmp.eq.s32.totalorder %s18, 1
    %p130 = por %p128, %p129
    %p132 = scmp.ne.s32.totalorder %s117, %s131
    %p133 = scmp.eq.s32.totalorder %s18, 0
    %p134 = por %p132, %p133
    %s136 = sadd.s32 %s135, 1
    %p139 = scmp.eq.s32.totalorder %s12, 1
    %p140 = scmp.ne.s32.totalorder %s135, %s137
    %p141 = scmp.eq.s32.totalorder %s12, 0
    %p142 = por %p140, %p141
    %p143 = scmp.ne.s32.totalorder %s135, %s137
    %p144 = scmp.eq.s32.totalorder %s17, 1
    %p145 = por %p143, %p144
    %p146 = scmp.ne.s32.totalorder %s137, %s138
    %p147 = scmp.eq.s32.totalorder %s17, 0
    %p148 = por %p146, %p147
    %p149 = scmp.ne.s32.totalorder %s137, %s138
    %p150 = scmp.eq.s32.totalorder %s18, 1
    %p151 = por %p149, %p150
    %p153 = scmp.ne.s32.totalorder %s138, %s152
    %p154 = scmp.eq.s32.totalorder %s18, 0
    %p155 = por %p153, %p154
    %s156 = ssub.s32 %s12, %s19
    %p157 = scmp.eq.s32.totalorder %s156, 0
    %s159 = sadd.s32 %s158, 1
    %s160 = scalar_select %p157, %s158, %s159
    %p163 = pneg %p157
    %p164 = scmp.eq.s32.totalorder %s12, 1
    %p165 = por %p163, %p164
    %p166 = scmp.ne.s32.totalorder %s158, %s161
    %p167 = scmp.eq.s32.totalorder %s12, 0
    %p168 = por %p166, %p167
    %p169 = scmp.ne.s32.totalorder %s158, %s161
    %p170 = scmp.eq.s32.totalorder %s17, 1
    %p171 = por %p169, %p170
    %p172 = scmp.ne.s32.totalorder %s161, %s162
    %p173 = scmp.eq.s32.totalorder %s17, 0
    %p174 = por %p172, %p173
    %p175 = scmp.ne.s32.totalorder %s161, %s162
    %p176 = scmp.eq.s32.totalorder %s18, 1
    %p177 = por %p175, %p176
    %p179 = scmp.ne.s32.totalorder %s162, %s178
    %p180 = scmp.eq.s32.totalorder %s18, 0
    %p181 = por %p179, %p180
    %p182 = scmp.le.s32.totalorder 1, %s12
    %p183 = scmp.lt.s32.totalorder %s12, 3
    %p184 = pnand %p182, %p183
    %p185 = pneg %p184
    // Predicated region
    $region9: #{_up_conv_block.1} parent=5 // pred_check
      _
    $region10: #{_up_conv_block.1} parent=5 // pred_check_branch
      %187 = sbr.rel (%p184) target = $region12
    $region11: #{_up_conv_block.1} parent=5 // pred_region
      %s188 = ssub.s32 %s12, 1
      // Predicated region
      $region13: #{_up_conv_block.1} parent=11 // pred_check
        %p189 = pneg %p85
      $region14: #{_up_conv_block.1} parent=11 // pred_check_branch
        %191 = sbr.rel (%p189) target = $region16
      $region15: #{_up_conv_block.1} parent=11 // pred_region
        _
      $region16: #{_up_conv_block.1} parent=11 // pred_fallthru
        _
      // Predicated region
      $region17: #{_up_conv_block.1} parent=11 // pred_check
        %p192 = pneg %p106
      $region18: #{_up_conv_block.1} parent=11 // pred_check_branch
        %194 = sbr.rel (%p192) target = $region20
      $region19: #{_up_conv_block.1} parent=11 // pred_region
        _
      $region20: #{_up_conv_block.1} parent=11 // pred_fallthru
        _
      // Predicated region
      $region21: #{_up_conv_block.1} parent=11 // pred_check
        %p195 = pneg %p127
      $region22: #{_up_conv_block.1} parent=11 // pred_check_branch
        %197 = sbr.rel (%p195) target = $region24
      $region23: #{_up_conv_block.1} parent=11 // pred_region
        _
      $region24: #{_up_conv_block.1} parent=11 // pred_fallthru
        _
      // Predicated region
      $region25: #{_up_conv_block.1} parent=11 // pred_check
        %p198 = pneg %p148
      $region26: #{_up_conv_block.1} parent=11 // pred_check_branch
        %200 = sbr.rel (%p198) target = $region28
      $region27: #{_up_conv_block.1} parent=11 // pred_region
        _
      $region28: #{_up_conv_block.1} parent=11 // pred_fallthru
        _
    $region12: #{_up_conv_block.1} parent=5 // pred_fallthru
      _
    %p201 = scmp.lt.s32.totalorder %s12, 2
    // Predicated region
    $region29: #{_up_conv_block.1} parent=5 // pred_check
      %p202 = pneg %p201
    $region30: #{_up_conv_block.1} parent=5 // pred_check_branch
      %204 = sbr.rel (%p202) target = $region32
    $region31: #{_up_conv_block.1} parent=5 // pred_region
      // Predicated region
      $region33: #{_up_conv_block.1} parent=31 // pred_check
        %p205 = pneg %p32
      $region34: #{_up_conv_block.1} parent=31 // pred_check_branch
        %207 = sbr.rel (%p205) target = $region36
      $region35: #{_up_conv_block.1} parent=31 // pred_region
        %p208 = scmp.lt.s32.totalorder %s12, 1
        %s209 = scalar_select %p208, %s12, 1
        %s210 = smul.addr %s209, 3
        %s211 = smul.addr %s210, 8
        %s212 = scalar_lea.vmem %s0, %s211
      $region36: #{_up_conv_block.1} parent=31 // pred_fallthru
        _
      // Predicated region
      $region37: #{_up_conv_block.1} parent=31 // pred_check
        %p213 = pneg %p58
      $region38: #{_up_conv_block.1} parent=31 // pred_check_branch
        %215 = sbr.rel (%p213) target = $region40
      $region39: #{_up_conv_block.1} parent=31 // pred_region
        %p216 = scmp.lt.s32.totalorder %s12, 1
        %s217 = scalar_select %p216, %s12, 1
        %s218 = smul.addr %s217, 3
        %s219 = smul.addr %s218, 8
        %s220 = scalar_lea.vmem %s1, %s219
      $region40: #{_up_conv_block.1} parent=31 // pred_fallthru
        _
    $region32: #{_up_conv_block.1} parent=5 // pred_fallthru
      _
    %p221 = scmp.le.s32.totalorder 1, %s12
    %p222 = scmp.lt.s32.totalorder %s12, 3
    %p223 = pnand %p221, %p222
    %p224 = pneg %p223
    // Predicated region
    $region41: #{_up_conv_block.1} parent=5 // pred_check
      _
    $region42: #{_up_conv_block.1} parent=5 // pred_check_branch
      %226 = sbr.rel (%p223) target = $region44
    $region43: #{_up_conv_block.1} parent=5 // pred_region
      %s227 = ssub.s32 %s12, 1
      %p228 = scmp.lt.s32.totalorder %s17, 1
      %s229 = scalar_select %p228, %s17, 1
      %s230 = smul.addr %s229, 3
      %s231 = smul.addr %s230, 8
      %s232 = scalar_lea.vmem %s0, %s231
      %p233 = pneg %p38
      %p234 = pneg %p35
      %p235 = scmp.lt.s32.totalorder %s17, 1
      %s236 = scalar_select %p235, %s17, 1
      %s237 = smul.addr %s236, 3
      %s238 = smul.addr %s237, 8
      %s239 = scalar_lea.vmem %s1, %s238
      %p240 = pneg %p64
      %p241 = pneg %p61
      %p242 = pneg %p85
      %p243 = pneg %p82
      %p244 = pneg %p106
      %p245 = pneg %p103
      %p246 = pneg %p127
      %p247 = pneg %p124
      %p248 = pneg %p148
      %p249 = pneg %p145
      %p250 = pneg %p174
      %p251 = pneg %p171
      %p252 = scmp.lt.s32.totalorder %s17, 1
      %s253 = scalar_select %p252, %s17, 1
      %s254 = smul.addr %s253, 3
      %s255 = smul.addr %s254, 8
      %s256 = scalar_lea.vmem %s6, %s255
      %p257 = scmp.lt.s32.totalorder %s17, 1
      %s258 = scalar_select %p257, %s17, 1
      %s259 = smul.addr %s258, 3
      %s260 = smul.addr %s259, 8
      %s261 = scalar_lea.vmem %s0, %s260
      %p262 = scmp.lt.s32.totalorder %s17, 1
      %s263 = scalar_select %p262, %s17, 1
      %s264 = smul.addr %s263, 3
      %s265 = smul.addr %s264, 8
      %s266 = scalar_lea.vmem %s1, %s265
      %p267 = scmp.lt.s32.totalorder %s17, 1
      %s268 = scalar_select %p267, %s17, 1
      %s269 = smul.addr %s268, 3
      %s270 = smul.addr %s269, 8
      %s271 = scalar_lea.vmem %s6, %s270
      %v273 = vld [vmem:[%s261] sm:$0xff]
      %v274 = vld [vmem:[%s261 + $0x8] sm:$0xff]
      %v275 = vld [vmem:[%s261 + $0x10] sm:$0xff]
      %vm276 = vcmp.gt.f32.partialorder %v273, 0.0
      %vm277 = vcmp.gt.f32.partialorder %v274, 0.0
      %vm278 = vcmp.gt.f32.partialorder %v275, 0.0
      %v279 = vmul.f32 %v273, 0.2
      %v280 = vmul.f32 %v274, 0.2
      %v281 = vmul.f32 %v275, 0.2
      %v282 = vsel %vm276, %v273, %v279
      %v283 = vsel %vm277, %v274, %v280
      %v284 = vsel %vm278, %v275, %v281
      %v285 = vpack.c.bf16 %v282, %v282
      %v286 = vpack.c.bf16 %v283, %v283
      %v287 = vpack.c.bf16 %v284, %v284
      %v288 = vpack.c.bf16 %v273, %v273
      %v289 = vpack.c.bf16 %v274, %v274
      %v290 = vpack.c.bf16 %v275, %v275
      %v291 = vld [vmem:[%s3] sm:$0xf]
      %295 = vrot.lane.b32.xlu0 %v285, 19
      %v296 = vpop.permute.xlu0 %295
      %297 = vrot.lane.b32.xlu0 %v286, 19
      %v298 = vpop.permute.xlu0 %297
      %299 = vrot.lane.b32.xlu0 %v287, 19
      %v300 = vpop.permute.xlu0 %299
      %vm301 = vcmask 154624
      %v302 = vsel %vm301, %v296, %v298
      %v303 = vsel %vm301, %v298, %v300
      %vm304 = vcmask 154624
      %v307 = vsel %vm304, 0, %v296
      %308 = vrot.lane.b32.xlu0 %v285, 18
      %v309 = vpop.permute.xlu0 %308
      %310 = vrot.lane.b32.xlu0 %v286, 18
      %v311 = vpop.permute.xlu0 %310
      %312 = vrot.lane.b32.xlu0 %v287, 18
      %v313 = vpop.permute.xlu0 %312
      %vm314 = vcmask 146432
      %v315 = vsel %vm314, %v309, %v311
      %v316 = vsel %vm314, %v311, %v313
      %vm317 = vcmask 146432
      %v319 = vsel %vm317, 0, %v309
      %320 = vrot.lane.b32.xlu0 %v285, 17
      %v321 = vpop.permute.xlu0 %320
      %322 = vrot.lane.b32.xlu0 %v286, 17
      %v323 = vpop.permute.xlu0 %322
      %324 = vrot.lane.b32.xlu0 %v287, 17
      %v325 = vpop.permute.xlu0 %324
      %vm326 = vcmask 138240
      %v327 = vsel %vm326, %v321, %v323
      %v328 = vsel %vm326, %v323, %v325
      %vm329 = vcmask 138240
      %v331 = vsel %vm329, 0, %v321
      %332 = vrot.lane.b32.xlu0 %v285, 1
      %v333 = vpop.permute.xlu0 %332
      %334 = vrot.lane.b32.xlu0 %v286, 1
      %v335 = vpop.permute.xlu0 %334
      %336 = vrot.lane.b32.xlu0 %v287, 1
      %v337 = vpop.permute.xlu0 %336
      %vm338 = vcmask 7168
      %v339 = vsel %vm338, %v333, %v335
      %v340 = vsel %vm338, %v335, %v337
      %vm341 = vcmask 7168
      %v343 = vsel %vm341, 0, %v333
      %344 = vrot.lane.b32.xlu0 %v285, 127
      %v345 = vpop.permute.xlu0 %344
      %346 = vrot.lane.b32.xlu0 %v286, 127
      %v347 = vpop.permute.xlu0 %346
      %348 = vrot.lane.b32.xlu0 %v287, 127
      %v349 = vpop.permute.xlu0 %348
      %vm350 = vcmask 1039360
      %v351 = vsel %vm350, %v345, %v347
      %v352 = vsel %vm350, %v347, %v349
      %vm353 = vcmask 1039360
      %v355 = vsel %vm353, %v349, 0
      %356 = vrot.lane.b32.xlu0 %v285, 111
      %v357 = vpop.permute.xlu0 %356
      %358 = vrot.lane.b32.xlu0 %v286, 111
      %v359 = vpop.permute.xlu0 %358
      %360 = vrot.lane.b32.xlu0 %v287, 111
      %v361 = vpop.permute.xlu0 %360
      %vm362 = vcmask 908288
      %v363 = vsel %vm362, %v357, %v359
      %v364 = vsel %vm362, %v359, %v361
      %vm365 = vcmask 908288
      %v367 = vsel %vm365, %v361, 0
      %368 = vrot.lane.b32.xlu0 %v285, 110
      %v369 = vpop.permute.xlu0 %368
      %370 = vrot.lane.b32.xlu0 %v286, 110
      %v371 = vpop.permute.xlu0 %370
      %372 = vrot.lane.b32.xlu0 %v287, 110
      %v373 = vpop.permute.xlu0 %372
      %vm374 = vcmask 900096
      %v375 = vsel %vm374, %v369, %v371
      %v376 = vsel %vm374, %v371, %v373
      %vm377 = vcmask 900096
      %v379 = vsel %vm377, %v373, 0
      %380 = vrot.lane.b32.xlu0 %v285, 109
      %v381 = vpop.permute.xlu0 %380
      %382 = vrot.lane.b32.xlu0 %v286, 109
      %v383 = vpop.permute.xlu0 %382
      %384 = vrot.lane.b32.xlu0 %v287, 109
      %v385 = vpop.permute.xlu0 %384
      %vm386 = vcmask 891904
      %v387 = vsel %vm386, %v381, %v383
      %v388 = vsel %vm386, %v383, %v385
      %vm389 = vcmask 891904
      %v391 = vsel %vm389, %v385, 0
      %v393 = vrot.slane %v319, 4
      %v394 = vrot.slane %v315, 4
      %v395 = vrot.slane %v316, 4
      %v397 = vrot.slane %v343, 4
      %v398 = vrot.slane %v339, 4
      %v399 = vrot.slane %v340, 4
      %v401 = vrot.slane %v351, 4
      %v402 = vrot.slane %v352, 4
      %v403 = vrot.slane %v355, 4
      %v405 = vrot.slane %v375, 4
      %v406 = vrot.slane %v376, 4
      %v407 = vrot.slane %v379, 4
      %vm408 = vcmask 1043456
      %v410 = vsel %vm408, %v307, %v393
      %v414 = vsel %vm408, %v302, %v394
      %v418 = vsel %vm408, %v303, %v395
      %v421 = vsel %vm408, %v331, %v397
      %v425 = vsel %vm408, %v327, %v398
      %v429 = vsel %vm408, %v328, %v399
      %v433 = vsel %vm408, %v285, %v401
      %v437 = vsel %vm408, %v286, %v402
      %v441 = vsel %vm408, %v287, %v403
      %v445 = vsel %vm408, %v363, %v405
      %v449 = vsel %vm408, %v364, %v406
      %v452 = vsel %vm408, %v367, %v407
      %v454 = vld [vmem:[%s266] sm:$0xff]
      %v455 = vld [vmem:[%s266 + $0x8] sm:$0xff]
      %v456 = vld [vmem:[%s266 + $0x10] sm:$0xff]
      %vm457 = vcmask 588800
      %v459 = vsel %vm457, %v291, 0
      %v462 = vsel %vm408, %v387, 0
      %v465 = vsel %vm408, %v388, 0
      %v467 = vsel %vm408, %v391, 0
      %469 = vmatprep.subr.bf16.mxu0 %v414
      %470 = vmatpush1.bf16.msra.mxu0 %v410
      %471 = vmatprep.subr.bf16.mxu0 %v425
      %472 = vmatpush1.bf16.msra.mxu0 %v421
      %473 = vmatprep.subr.bf16.mxu0 %v437
      %474 = vmatpush1.bf16.msra.mxu0 %v433
      %475 = vmatprep.subr.bf16.mxu0 %v449
      %476 = vmatpush1.bf16.msra.mxu0 %v445
      %477 = vmatprep.subr.bf16.mxu0 %v465
      %478 = vmatpush1.bf16.msra.mxu0 %v462
      %479 = vmatprep.subr.bf16.mxu0 0
      %480 = vmatpush1.bf16.msra.mxu0 0
      %481 = vmatprep.subr.bf16.mxu0 0
      %482 = vmatpush1.bf16.msra.mxu0 0
      %483 = vmatprep.subr.bf16.mxu0 0
      %484 = vmatpush1.bf16.msra.mxu0 0
      %485 = vmatprep.subr.bf16.mxu0 0
      %486 = vmatpush1.bf16.msra.mxu0 0
      %487 = vmatprep.subr.bf16.mxu0 0
      %488 = vmatpush1.bf16.msra.mxu0 0
      %489 = vmatprep.subr.bf16.mxu0 0
      %490 = vmatpush1.bf16.msra.mxu0 0
      %491 = vmatprep.subr.bf16.mxu0 0
      %492 = vmatpush1.bf16.msra.mxu0 0
      %493 = vmatprep.subr.bf16.mxu0 0
      %494 = vmatpush1.bf16.msra.mxu0 0
      %495 = vmatprep.subr.bf16.mxu0 0
      %496 = vmatpush1.bf16.msra.mxu0 0
      %497 = vmatprep.subr.bf16.mxu0 0
      %498 = vmatpush1.bf16.msra.mxu0 0
      %499 = vmatprep.subr.bf16.mxu0 0
      %500 = vmatpush1.bf16.msra.mxu0 0
      %501 = vmatprep.mubr.bf16.mxu0 0
      %502 = vmatmul.mubr.bf16.gmra.mrb[0].mxu0 %v459
      %v503 = vpop.f32.mrb[0].mxu0
      %v504 = vadd.f32 %v454, %v503
      %v505 = vpop.f32.mrb[0].mxu0
      %v506 = vadd.f32 %v455, %v505
      %v507 = vpop.f32.mrb[0].mxu0
      %v508 = vpop.f32.mrb[0].mxu0
      %509 = vdwg.mxu0
      %510 = vmatprep.subr.bf16.mxu0 0
      %511 = vmatpush1.bf16.msra.mxu0 %v418
      %512 = vmatprep.subr.bf16.mxu0 0
      %513 = vmatpush1.bf16.msra.mxu0 %v429
      %514 = vmatprep.subr.bf16.mxu0 0
      %515 = vmatpush1.bf16.msra.mxu0 %v441
      %516 = vmatprep.subr.bf16.mxu0 0
      %517 = vmatpush1.bf16.msra.mxu0 %v452
      %518 = vmatprep.subr.bf16.mxu0 0
      %519 = vmatpush1.bf16.msra.mxu0 %v467
      %520 = vmatprep.subr.bf16.mxu0 0
      %521 = vmatpush1.bf16.msra.mxu0 0
      %522 = vmatprep.subr.bf16.mxu0 0
      %523 = vmatpush1.bf16.msra.mxu0 0
      %524 = vmatprep.subr.bf16.mxu0 0
      %525 = vmatpush1.bf16.msra.mxu0 0
      %526 = vmatprep.subr.bf16.mxu0 0
      %527 = vmatpush1.bf16.msra.mxu0 0
      %528 = vmatprep.subr.bf16.mxu0 0
      %529 = vmatpush1.bf16.msra.mxu0 0
      %530 = vmatprep.subr.bf16.mxu0 0
      %531 = vmatpush1.bf16.msra.mxu0 0
      %532 = vmatprep.subr.bf16.mxu0 0
      %533 = vmatpush1.bf16.msra.mxu0 0
      %534 = vmatprep.subr.bf16.mxu0 0
      %535 = vmatpush1.bf16.msra.mxu0 0
      %536 = vmatprep.subr.bf16.mxu0 0
      %537 = vmatpush1.bf16.msra.mxu0 0
      %538 = vmatprep.subr.bf16.mxu0 0
      %539 = vmatpush1.bf16.msra.mxu0 0
      %540 = vmatprep.subr.bf16.mxu0 0
      %541 = vmatpush1.bf16.msra.mxu0 0
      %542 = vmatprep.mubr.bf16.mxu0 0
      %543 = vmatmul.mubr.bf16.gmra.mrb[0].mxu0 %v459
      %v544 = vpop.f32.mrb[0].mxu0
      %v545 = vadd.f32 %v456, %v544
      %v546 = vpop.f32.mrb[0].mxu0
      %v547 = vpop.f32.mrb[0].mxu0
      %v548 = vpop.f32.mrb[0].mxu0
      %549 = vdwg.mxu0
      %vm550 = vcmp.gt.f32.partialorder %v504, 0.0
      %vm551 = vcmp.gt.f32.partialorder %v506, 0.0
      %vm552 = vcmp.gt.f32.partialorder %v545, 0.0
      %v553 = vmul.f32 %v504, 0.2
      %v554 = vmul.f32 %v506, 0.2
      %v555 = vmul.f32 %v545, 0.2
      %v556 = vsel %vm550, %v504, %v553
      %v557 = vsel %vm551, %v506, %v554
      %v558 = vsel %vm552, %v545, %v555
      %v559 = vld [vmem:[%s2] sm:$0x7]
      %v561 = vlaneseq
      %v562 = vshrl.u32 %v561, 7
      %v563 = vsub.s32 0, %v562
      %v564 = vrot.slane %v559, %v563
      %v565 = vlaneseq
      %v566 = vshrl.u32 %v565, 7
      %v567 = vsub.s32 1, %v566
      %v568 = vrot.slane %v559, %v567
      %v569 = vlaneseq
      %v570 = vshrl.u32 %v569, 7
      %v571 = vsub.s32 2, %v570
      %v572 = vrot.slane %v559, %v571
      %v576 = vmul.f32 %v556, %v564
      %v577 = vmul.f32 %v557, %v568
      %v578 = vmul.f32 %v558, %v572
      %v579 = vpack.c.bf16 %v576, %v576
      %v580 = vpack.c.bf16 %v577, %v577
      %v581 = vpack.c.bf16 %v578, %v578
      %585 = vrot.lane.b32.xlu0 %v579, 19
      %v586 = vpop.permute.xlu0 %585
      %587 = vrot.lane.b32.xlu0 %v580, 19
      %v588 = vpop.permute.xlu0 %587
      %589 = vrot.lane.b32.xlu0 %v581, 19
      %v590 = vpop.permute.xlu0 %589
      %v591 = vsel %vm301, %v586, %v588
      %v592 = vsel %vm301, %v588, %v590
      %v594 = vsel %vm304, 0, %v586
      %595 = vrot.lane.b32.xlu0 %v579, 18
      %v596 = vpop.permute.xlu0 %595
      %597 = vrot.lane.b32.xlu0 %v580, 18
      %v598 = vpop.permute.xlu0 %597
      %599 = vrot.lane.b32.xlu0 %v581, 18
      %v600 = vpop.permute.xlu0 %599
      %v601 = vsel %vm314, %v596, %v598
      %v602 = vsel %vm314, %v598, %v600
      %v604 = vsel %vm317, 0, %v596
      %605 = vrot.lane.b32.xlu0 %v579, 17
      %v606 = vpop.permute.xlu0 %605
      %607 = vrot.lane.b32.xlu0 %v580, 17
      %v608 = vpop.permute.xlu0 %607
      %609 = vrot.lane.b32.xlu0 %v581, 17
      %v610 = vpop.permute.xlu0 %609
      %v611 = vsel %vm326, %v606, %v608
      %v612 = vsel %vm326, %v608, %v610
      %v614 = vsel %vm329, 0, %v606
      %615 = vrot.lane.b32.xlu0 %v579, 1
      %v616 = vpop.permute.xlu0 %615
      %617 = vrot.lane.b32.xlu0 %v580, 1
      %v618 = vpop.permute.xlu0 %617
      %619 = vrot.lane.b32.xlu0 %v581, 1
      %v620 = vpop.permute.xlu0 %619
      %v621 = vsel %vm338, %v616, %v618
      %v622 = vsel %vm338, %v618, %v620
      %v624 = vsel %vm341, 0, %v616
      %625 = vrot.lane.b32.xlu0 %v579, 127
      %v626 = vpop.permute.xlu0 %625
      %627 = vrot.lane.b32.xlu0 %v580, 127
      %v628 = vpop.permute.xlu0 %627
      %629 = vrot.lane.b32.xlu0 %v581, 127
      %v630 = vpop.permute.xlu0 %629
      %v631 = vsel %vm350, %v626, %v628
      %v632 = vsel %vm350, %v628, %v630
      %v634 = vsel %vm353, %v630, 0
      %635 = vrot.lane.b32.xlu0 %v579, 111
      %v636 = vpop.permute.xlu0 %635
      %637 = vrot.lane.b32.xlu0 %v580, 111
      %v638 = vpop.permute.xlu0 %637
      %639 = vrot.lane.b32.xlu0 %v581, 111
      %v640 = vpop.permute.xlu0 %639
      %v641 = vsel %vm362, %v636, %v638
      %v642 = vsel %vm362, %v638, %v640
      %v644 = vsel %vm365, %v640, 0
      %645 = vrot.lane.b32.xlu0 %v579, 110
      %v646 = vpop.permute.xlu0 %645
      %647 = vrot.lane.b32.xlu0 %v580, 110
      %v648 = vpop.permute.xlu0 %647
      %649 = vrot.lane.b32.xlu0 %v581, 110
      %v650 = vpop.permute.xlu0 %649
      %v651 = vsel %vm374, %v646, %v648
      %v652 = vsel %vm374, %v648, %v650
      %v654 = vsel %vm377, %v650, 0
      %655 = vrot.lane.b32.xlu0 %v579, 109
      %v656 = vpop.permute.xlu0 %655
      %657 = vrot.lane.b32.xlu0 %v580, 109
      %v658 = vpop.permute.xlu0 %657
      %659 = vrot.lane.b32.xlu0 %v581, 109
      %v660 = vpop.permute.xlu0 %659
      %v661 = vsel %vm386, %v656, %v658
      %v662 = vsel %vm386, %v658, %v660
      %v664 = vsel %vm389, %v660, 0
      %v666 = vrot.slane %v604, 4
      %v667 = vrot.slane %v601, 4
      %v668 = vrot.slane %v602, 4
      %v670 = vrot.slane %v624, 4
      %v671 = vrot.slane %v621, 4
      %v672 = vrot.slane %v622, 4
      %v674 = vrot.slane %v631, 4
      %v675 = vrot.slane %v632, 4
      %v676 = vrot.slane %v634, 4
      %v678 = vrot.slane %v651, 4
      %v679 = vrot.slane %v652, 4
      %v680 = vrot.slane %v654, 4
      %v682 = vsel %vm408, %v594, %v666
      %v686 = vsel %vm408, %v591, %v667
      %v690 = vsel %vm408, %v592, %v668
      %v693 = vsel %vm408, %v614, %v670
      %v697 = vsel %vm408, %v611, %v671
      %v701 = vsel %vm408, %v612, %v672
      %v705 = vsel %vm408, %v579, %v674
      %v709 = vsel %vm408, %v580, %v675
      %v713 = vsel %vm408, %v581, %v676
      %v717 = vsel %vm408, %v641, %v678
      %v721 = vsel %vm408, %v642, %v679
      %v724 = vsel %vm408, %v644, %v680
      %v729 = vrot.slane %v288, 4
      %v730 = vrot.slane %v289, 4
      %v731 = vrot.slane %v290, 4
      %v734 = vsel %vm408, %v661, %v729
      %v738 = vsel %vm408, %v662, %v730
      %v741 = vsel %vm408, %v664, %v731
      %v743 = vld [vmem:[%s4] sm:$0xf]
      %v744 = vld [vmem:[%s5] sm:$0xff]
      %746 = vset.pattern.permute.xlu0 0
      %747 = vperm.xlu0 %746, %v744
      %v748 = vpop.permute.xlu0 %747
      %vm750 = vcmask 654336
      %v752 = vsel %vm750, %v743, 0
      %754 = vmatprep.subr.bf16.mxu0 %v686
      %755 = vmatpush1.bf16.msra.mxu0 %v682
      %756 = vmatprep.subr.bf16.mxu0 %v697
      %757 = vmatpush1.bf16.msra.mxu0 %v693
      %758 = vmatprep.subr.bf16.mxu0 %v709
      %759 = vmatpush1.bf16.msra.mxu0 %v705
      %760 = vmatprep.subr.bf16.mxu0 %v721
      %761 = vmatpush1.bf16.msra.mxu0 %v717
      %762 = vmatprep.subr.bf16.mxu0 %v738
      %763 = vmatpush1.bf16.msra.mxu0 %v734
      %764 = vmatprep.subr.bf16.mxu0 0
      %765 = vmatpush1.bf16.msra.mxu0 0
      %766 = vmatprep.subr.bf16.mxu0 0
      %767 = vmatpush1.bf16.msra.mxu0 0
      %768 = vmatprep.subr.bf16.mxu0 0
      %769 = vmatpush1.bf16.msra.mxu0 0
      %770 = vmatprep.subr.bf16.mxu0 0
      %771 = vmatpush1.bf16.msra.mxu0 0
      %772 = vmatprep.subr.bf16.mxu0 0
      %773 = vmatpush1.bf16.msra.mxu0 0
      %774 = vmatprep.subr.bf16.mxu0 0
      %775 = vmatpush1.bf16.msra.mxu0 0
      %776 = vmatprep.subr.bf16.mxu0 0
      %777 = vmatpush1.bf16.msra.mxu0 0
      %778 = vmatprep.subr.bf16.mxu0 0
      %779 = vmatpush1.bf16.msra.mxu0 0
      %780 = vmatprep.subr.bf16.mxu0 0
      %781 = vmatpush1.bf16.msra.mxu0 0
      %782 = vmatprep.subr.bf16.mxu0 0
      %783 = vmatpush1.bf16.msra.mxu0 0
      %784 = vmatprep.subr.bf16.mxu0 0
      %785 = vmatpush1.bf16.msra.mxu0 0
      %786 = vmatprep.mubr.bf16.mxu0 0
      %787 = vmatmul.mubr.bf16.gmra.mrb[0].mxu0 %v752
      %v788 = vpop.f32.mrb[0].mxu0
      %v789 = vadd.f32 %v748, %v788
      %v790 = vpop.f32.mrb[0].mxu0
      %v791 = vadd.f32 %v748, %v790
      %v792 = vpop.f32.mrb[0].mxu0
      %v793 = vpop.f32.mrb[0].mxu0
      %794 = vdwg.mxu0
      %795 = vmatprep.subr.bf16.mxu0 0
      %796 = vmatpush1.bf16.msra.mxu0 %v690
      %797 = vmatprep.subr.bf16.mxu0 0
      %798 = vmatpush1.bf16.msra.mxu0 %v701
      %799 = vmatprep.subr.bf16.mxu0 0
      %800 = vmatpush1.bf16.msra.mxu0 %v713
      %801 = vmatprep.subr.bf16.mxu0 0
      %802 = vmatpush1.bf16.msra.mxu0 %v724
      %803 = vmatprep.subr.bf16.mxu0 0
      %804 = vmatpush1.bf16.msra.mxu0 %v741
      %805 = vmatprep.subr.bf16.mxu0 0
      %806 = vmatpush1.bf16.msra.mxu0 0
      %807 = vmatprep.subr.bf16.mxu0 0
      %808 = vmatpush1.bf16.msra.mxu0 0
      %809 = vmatprep.subr.bf16.mxu0 0
      %810 = vmatpush1.bf16.msra.mxu0 0
      %811 = vmatprep.subr.bf16.mxu0 0
      %812 = vmatpush1.bf16.msra.mxu0 0
      %813 = vmatprep.subr.bf16.mxu0 0
      %814 = vmatpush1.bf16.msra.mxu0 0
      %815 = vmatprep.subr.bf16.mxu0 0
      %816 = vmatpush1.bf16.msra.mxu0 0
      %817 = vmatprep.subr.bf16.mxu0 0
      %818 = vmatpush1.bf16.msra.mxu0 0
      %819 = vmatprep.subr.bf16.mxu0 0
      %820 = vmatpush1.bf16.msra.mxu0 0
      %821 = vmatprep.subr.bf16.mxu0 0
      %822 = vmatpush1.bf16.msra.mxu0 0
      %823 = vmatprep.subr.bf16.mxu0 0
      %824 = vmatpush1.bf16.msra.mxu0 0
      %825 = vmatprep.subr.bf16.mxu0 0
      %826 = vmatpush1.bf16.msra.mxu0 0
      %827 = vmatprep.mubr.bf16.mxu0 0
      %828 = vmatmul.mubr.bf16.gmra.mrb[0].mxu0 %v752
      %v829 = vpop.f32.mrb[0].mxu0
      %v830 = vadd.f32 %v748, %v829
      %v831 = vpop.f32.mrb[0].mxu0
      %v832 = vpop.f32.mrb[0].mxu0
      %v833 = vpop.f32.mrb[0].mxu0
      %834 = vdwg.mxu0
      %v835 = vmul.f32 %v789, 0.70710677
      %v836 = vmul.f32 %v791, 0.70710677
      %v837 = vmul.f32 %v830, 0.70710677
      %838 = vst [vmem:[%s271] sm:$0xff] %v835
      %839 = vst [vmem:[%s271 + $0x8] sm:$0xff] %v836
      %840 = vst [vmem:[%s271 + $0x10] sm:$0xff] %v837
      %p841 = scmp.lt.s32.totalorder %s17, 1
      %s842 = scalar_select %p841, %s17, 1
      %s843 = smul.addr %s842, 3
      %s844 = smul.addr %s843, 8
      %s845 = scalar_lea.vmem %s6, %s844
      // Predicated region
      $region45: #{_up_conv_block.1} parent=43 // pred_check
        %p846 = pneg %p171
      $region46: #{_up_conv_block.1} parent=43 // pred_check_branch
        %848 = sbr.rel (%p846) target = $region48
      $region47: #{_up_conv_block.1} parent=43 // pred_region
        _
      $region48: #{_up_conv_block.1} parent=43 // pred_fallthru
        _
    $region44: #{_up_conv_block.1} parent=5 // pred_fallthru
      _
    %p849 = scmp.le.s32.totalorder 2, %s12
    // Predicated region
    $region49: #{_up_conv_block.1} parent=5 // pred_check
      %p850 = pneg %p849
    $region50: #{_up_conv_block.1} parent=5 // pred_check_branch
      %852 = sbr.rel (%p850) target = $region52
    $region51: #{_up_conv_block.1} parent=5 // pred_region
      %s853 = ssub.s32 %s12, 2
      // Predicated region
      $region53: #{_up_conv_block.1} parent=51 // pred_check
        %p854 = pneg %p177
      $region54: #{_up_conv_block.1} parent=51 // pred_check_branch
        %856 = sbr.rel (%p854) target = $region56
      $region55: #{_up_conv_block.1} parent=51 // pred_region
        %p857 = scmp.lt.s32.totalorder %s18, 1
        %s858 = scalar_select %p857, %s18, 1
        %s859 = smul.addr %s858, 3
        %s860 = smul.addr %s859, 8
        %s861 = scalar_lea.vmem %s6, %s860
      $region56: #{_up_conv_block.1} parent=51 // pred_fallthru
        _
    $region52: #{_up_conv_block.1} parent=5 // pred_fallthru
      _
  $region6: #{_up_conv_block.1} parent=0 // loop_footer
    %s16 = sadd.s32 1, %s12
  $region7: #{_up_conv_block.1} parent=0 // loop_footer_branch
    %11 = sbr.rel target = $region3
  $region8: #{_up_conv_block.1} parent=0 // loop_exit
    _

</llo_original>
